<compile_context>
chip_gen: v7x
topology: tpu7x:2x2x1
jax: 0.10.0
libtpu: 0.0.40
codegen_flags: <defaults>
</compile_context>

<pallas_src>
import jax
import jax.numpy as jnp
from jax.experimental import pallas as pl
from jax.experimental.pallas import tpu as pltpu


def _round_up(x, m):
    return ((x + m - 1) // m) * m


def _leaky_relu(x, slope=0.2):
    # slope < 1  =>  max(x, slope*x) == leaky_relu(x); one vmul + one vmax.
    return jnp.maximum(x, slope * x)


def _pick_batch_tile(B):
    """Batch tile selection.

    Small B: single grid step with the whole batch as the block (full-dim
    exception covers any B, including B < 8). Large B: big tiles for the HBM
    roofline, but keep >=2 grid steps so dimension_semantics=("parallel",)
    can shard the batch axis across both TensorCores on v7x."""
    if B <= 128:
        return B
    for tb in (512, 256, 128):
        if B >= 2 * tb:
            return tb
    return 128


def mlp_g_kernel(x_ref, c_ref,
                 w1x_ref, w1c_ref, b1_ref,
                 w2_ref, b2_ref,
                 w3_ref, b3_ref,
                 w4_ref, b4_ref,
                 out_ref):
    cd = jnp.bfloat16
    # Layer 1: split matmul replaces concat([x, c], -1) @ W1 (no HBM concat,
    # no wrapper roundtrip). f32 accumulation on the MXU.
    h = jnp.dot(x_ref[...].astype(cd), w1x_ref[...],
                preferred_element_type=jnp.float32)
    h = h + jnp.dot(c_ref[...].astype(cd), w1c_ref[...],
                    preferred_element_type=jnp.float32)
    h = _leaky_relu(h + b1_ref[...]).astype(cd)
    # Layer 2: -> 2*ngf (lane-dense padded width)
    h = _leaky_relu(jnp.dot(h, w2_ref[...], preferred_element_type=jnp.float32)
                    + b2_ref[...]).astype(cd)
    # Layer 3: -> 4*ngf
    h = _leaky_relu(jnp.dot(h, w3_ref[...], preferred_element_type=jnp.float32)
                    + b3_ref[...]).astype(cd)
    # Layer 4: -> n_features (no activation, matches nn.Sequential tail)
    out_ref[...] = (jnp.dot(h, w4_ref[...], preferred_element_type=jnp.float32)
                    + b4_ref[...]).astype(out_ref.dtype)


def prepare_params(params, nz):
    """One-time (per weight update) weight prep, kept OUT of the jitted
    forward: pad hidden widths to lane-dense multiples of 128, cast MXU
    operands to bf16, split W1 into x-part / c-part so the kernel never
    needs the concatenated input. Padding is mathematically inert: zero
    weight columns + zero bias keep padded lanes exactly 0 through LeakyReLU.
    Output columns (n_features) are NOT padded."""
    (w1, b1), (w2, b2), (w3, b3), (w4, b4) = params
    cd = jnp.bfloat16
    ngf = w1.shape[1]
    D1 = _round_up(ngf, 128)
    D2 = _round_up(w2.shape[1], 128)
    D3 = _round_up(w3.shape[1], 128)

    w1x = jnp.pad(w1[:nz], ((0, 0), (0, D1 - ngf))).astype(cd)
    w1c = jnp.pad(w1[nz:], ((0, 0), (0, D1 - ngf))).astype(cd)
    b1p = jnp.pad(b1, ((0, 0), (0, D1 - b1.shape[1])))
    w2p = jnp.pad(w2, ((0, D1 - w2.shape[0]), (0, D2 - w2.shape[1]))).astype(cd)
    b2p = jnp.pad(b2, ((0, 0), (0, D2 - b2.shape[1])))
    w3p = jnp.pad(w3, ((0, D2 - w3.shape[0]), (0, D3 - w3.shape[1]))).astype(cd)
    b3p = jnp.pad(b3, ((0, 0), (0, D3 - b3.shape[1])))
    w4p = jnp.pad(w4, ((0, D3 - w4.shape[0]), (0, 0))).astype(cd)
    b4p = b4  # biases stay f32 (added after the f32 accumulation)
    return (w1x, w1c, b1p, w2p, b2p, w3p, b3p, w4p, b4p)


def mlp_g_forward(x, c, prepared):
    """x: (B, nz) f32, c: (B, n_classes) f32, prepared = prepare_params(...).
    Returns (B, n_features) float32 == Linear/LeakyReLU stack of MLP_G."""
    w1x, w1c, b1, w2, b2, w3, b3, w4, b4 = prepared
    B, nz = x.shape
    nc = c.shape[1]
    D1, D2, D3, DO = w1x.shape[1], w2.shape[1], w3.shape[1], w4.shape[1]

    TB = _pick_batch_tile(B)
    grid = (pl.cdiv(B, TB),)  # partial last block handled by Pallas (rows
    #                           past B are never written back)

    row = lambda w: pl.BlockSpec((TB, w), lambda i: (i, 0))      # batch-tiled
    res = lambda r, w: pl.BlockSpec((r, w), lambda i: (0, 0))    # VMEM-resident
    # TODO(synk): on v7x with very large ngf, add pipeline_mode=pl.Buffered(1)
    # to the resident weight specs to halve their VMEM footprint.

    flops = 2 * B * (nz * D1 + nc * D1 + D1 * D2 + D2 * D3 + D3 * DO)
    weight_bytes = sum(int(a.size) * a.dtype.itemsize for a in prepared)
    act_bytes = (int(x.size) * x.dtype.itemsize
                 + int(c.size) * c.dtype.itemsize
                 + B * DO * 4)
    cost = pl.CostEstimate(flops=flops, transcendentals=0,
                           bytes_accessed=weight_bytes + act_bytes)

    return pl.pallas_call(
        mlp_g_kernel,
        out_shape=jax.ShapeDtypeStruct((B, DO), jnp.float32),
        grid=grid,
        in_specs=[
            row(nz),            # x tile
            row(nc),            # c tile
            res(nz, D1),        # w1 (x rows)
            res(nc, D1),        # w1 (c rows)
            res(1, D1),         # b1
            res(D1, D2),        # w2
            res(1, D2),         # b2
            res(D2, D3),        # w3
            res(1, D3),         # b3
            res(D3, DO),        # w4
            res(1, DO),         # b4
        ],
        out_specs=pl.BlockSpec((TB, DO), lambda i: (i, 0)),
        compiler_params=pltpu.CompilerParams(
            dimension_semantics=("parallel",),
            vmem_limit_bytes=64 * 1024 * 1024),
        cost_estimate=cost,
    )(x, c, w1x, w1c, b1, w2, b2, w3, b3, w4, b4)


def init_params(key, n_classes, n_features, nz, ngf):
    """Weights stored (in_dim, out_dim) so the kernel computes x @ W + b
    (equivalent to PyTorch's x @ W.T + b). PyTorch-default uniform init."""
    dims = [(nz + n_classes, ngf),
            (ngf, ngf * 2),
            (ngf * 2, ngf * 4),
            (ngf * 4, n_features)]
    params = []
    for (din, dout) in dims:
        key, kw, kb = jax.random.split(key, 3)
        bound = 1.0 / (din ** 0.5)
        w = jax.random.uniform(kw, (din, dout), jnp.float32, -bound, bound)
        b = jax.random.uniform(kb, (1, dout), jnp.float32, -bound, bound)
        params.append((w, b))
    return params


def _reference(x, c, params):
    h = jnp.concatenate([x, c], axis=-1)
    (w1, b1), (w2, b2), (w3, b3), (w4, b4) = params
    lrelu = lambda v: jnp.where(v > 0, v, 0.2 * v)
    h = lrelu(h @ w1 + b1)
    h = lrelu(h @ w2 + b2)
    h = lrelu(h @ w3 + b3)
    return h @ w4 + b4


if __name__ == "__main__":
    # Small shapes consistent with the module's forward.
    B, n_classes, n_features, nz, ngf = 8, 4, 64, 32, 32

    key = jax.random.PRNGKey(0)
    kx, kc, kp = jax.random.split(key, 3)
    x = jax.random.normal(kx, (B, nz), jnp.float32)
    labels = jax.random.randint(kc, (B,), 0, n_classes)
    c = jax.nn.one_hot(labels, n_classes, dtype=jnp.float32)

    params = init_params(kp, n_classes, n_features, nz, ngf)
    prepared = prepare_params(params, nz)   # one-time pad/cast, outside the jit

    fwd = jax.jit(mlp_g_forward)
    out = jax.block_until_ready(fwd(x, c, prepared))

    ref = _reference(x, c, params)
    assert out.shape == (B, n_features)
    # bf16 MXU operands with f32 accumulation vs full-f32 reference.
    assert jnp.allclose(out, ref, atol=5e-2, rtol=5e-2)
    print("KERNEL_OK")
</pallas_src>

<mosaic_0001>
module attributes {stable_mosaic.version = 11 : i64} {
  func.func @mlp_g_kernel(%arg0: i32, %arg1: memref<8x32xf32, #tpu.memory_space<vmem>>, %arg2: memref<8x4xf32, #tpu.memory_space<vmem>>, %arg3: memref<32x128xbf16, #tpu.memory_space<vmem>>, %arg4: memref<4x128xbf16, #tpu.memory_space<vmem>>, %arg5: memref<1x128xf32, #tpu.memory_space<vmem>>, %arg6: memref<128x128xbf16, #tpu.memory_space<vmem>>, %arg7: memref<1x128xf32, #tpu.memory_space<vmem>>, %arg8: memref<128x128xbf16, #tpu.memory_space<vmem>>, %arg9: memref<1x128xf32, #tpu.memory_space<vmem>>, %arg10: memref<128x64xbf16, #tpu.memory_space<vmem>>, %arg11: memref<1x64xf32, #tpu.memory_space<vmem>>, %arg12: memref<8x64xf32, #tpu.memory_space<vmem>>) attributes {dimension_semantics = [#tpu.dimension_semantics<parallel>], iteration_bounds = array<i64: 1>, scalar_prefetch = 0 : i64, scratch_operands = 0 : i64, tpu.core_type = #tpu.core_type<tc>, window_params = [{transform_indices = @transform_0, window_bounds = array<i64: 8, 32>}, {transform_indices = @transform_1, window_bounds = array<i64: 8, 4>}, {pipeline_mode = #tpu.pipeline_mode<synchronous>, transform_indices = @transform_2, window_bounds = array<i64: 32, 128>}, {pipeline_mode = #tpu.pipeline_mode<synchronous>, transform_indices = @transform_3, window_bounds = array<i64: 4, 128>}, {pipeline_mode = #tpu.pipeline_mode<synchronous>, transform_indices = @transform_4, window_bounds = array<i64: 1, 128>}, {pipeline_mode = #tpu.pipeline_mode<synchronous>, transform_indices = @transform_5, window_bounds = array<i64: 128, 128>}, {pipeline_mode = #tpu.pipeline_mode<synchronous>, transform_indices = @transform_6, window_bounds = array<i64: 1, 128>}, {pipeline_mode = #tpu.pipeline_mode<synchronous>, transform_indices = @transform_7, window_bounds = array<i64: 128, 128>}, {pipeline_mode = #tpu.pipeline_mode<synchronous>, transform_indices = @transform_8, window_bounds = array<i64: 1, 128>}, {pipeline_mode = #tpu.pipeline_mode<synchronous>, transform_indices = @transform_9, window_bounds = array<i64: 128, 64>}, {pipeline_mode = #tpu.pipeline_mode<synchronous>, transform_indices = @transform_10, window_bounds = array<i64: 1, 64>}, {transform_indices = @transform_11, window_bounds = array<i64: 8, 64>}]} {
    %c0 = arith.constant 0 : index
    %c0_0 = arith.constant 0 : index
    %0 = vector.load %arg1[%c0, %c0_0] : memref<8x32xf32, #tpu.memory_space<vmem>>, vector<8x32xf32>
    %1 = arith.truncf %0 : vector<8x32xf32> to vector<8x32xbf16>
    %c0_1 = arith.constant 0 : index
    %c0_2 = arith.constant 0 : index
    %2 = vector.load %arg3[%c0_1, %c0_2] : memref<32x128xbf16, #tpu.memory_space<vmem>>, vector<32x128xbf16>
    %cst = arith.constant dense<0.000000e+00> : vector<8x128xf32>
    %3 = tpu.matmul %1, %2, %cst {dimension_numbers = #tpu.dot_dimension_numbers<[1], [0], [0], [1], [0, 0, 1, 1], [], []>} : vector<8x32xbf16>, vector<32x128xbf16>, vector<8x128xf32> -> vector<8x128xf32>
    %c0_3 = arith.constant 0 : index
    %c0_4 = arith.constant 0 : index
    %4 = vector.load %arg2[%c0_3, %c0_4] : memref<8x4xf32, #tpu.memory_space<vmem>>, vector<8x4xf32>
    %5 = arith.truncf %4 : vector<8x4xf32> to vector<8x4xbf16>
    %c0_5 = arith.constant 0 : index
    %c0_6 = arith.constant 0 : index
    %6 = vector.load %arg4[%c0_5, %c0_6] : memref<4x128xbf16, #tpu.memory_space<vmem>>, vector<4x128xbf16>
    %cst_7 = arith.constant dense<0.000000e+00> : vector<8x128xf32>
    %7 = tpu.matmul %5, %6, %cst_7 {dimension_numbers = #tpu.dot_dimension_numbers<[1], [0], [0], [1], [0, 0, 1, 1], [], []>} : vector<8x4xbf16>, vector<4x128xbf16>, vector<8x128xf32> -> vector<8x128xf32>
    %8 = arith.addf %3, %7 : vector<8x128xf32>
    %c0_8 = arith.constant 0 : index
    %c0_9 = arith.constant 0 : index
    %9 = vector.load %arg5[%c0_8, %c0_9] : memref<1x128xf32, #tpu.memory_space<vmem>>, vector<1x128xf32>
    %10 = vector.broadcast %9 : vector<1x128xf32> to vector<8x128xf32>
    %11 = arith.addf %8, %10 : vector<8x128xf32>
    %cst_10 = arith.constant 2.000000e-01 : f32
    %12 = vector.broadcast %cst_10 : f32 to vector<8x128xf32>
    %13 = arith.mulf %12, %11 : vector<8x128xf32>
    %14 = arith.maximumf %11, %13 : vector<8x128xf32>
    %15 = arith.truncf %14 : vector<8x128xf32> to vector<8x128xbf16>
    %c0_11 = arith.constant 0 : index
    %c0_12 = arith.constant 0 : index
    %16 = vector.load %arg6[%c0_11, %c0_12] : memref<128x128xbf16, #tpu.memory_space<vmem>>, vector<128x128xbf16>
    %cst_13 = arith.constant dense<0.000000e+00> : vector<8x128xf32>
    %17 = tpu.matmul %15, %16, %cst_13 {dimension_numbers = #tpu.dot_dimension_numbers<[1], [0], [0], [1], [0, 0, 1, 1], [], []>} : vector<8x128xbf16>, vector<128x128xbf16>, vector<8x128xf32> -> vector<8x128xf32>
    %c0_14 = arith.constant 0 : index
    %c0_15 = arith.constant 0 : index
    %18 = vector.load %arg7[%c0_14, %c0_15] : memref<1x128xf32, #tpu.memory_space<vmem>>, vector<1x128xf32>
    %19 = vector.broadcast %18 : vector<1x128xf32> to vector<8x128xf32>
    %20 = arith.addf %17, %19 : vector<8x128xf32>
    %cst_16 = arith.constant 2.000000e-01 : f32
    %21 = vector.broadcast %cst_16 : f32 to vector<8x128xf32>
    %22 = arith.mulf %21, %20 : vector<8x128xf32>
    %23 = arith.maximumf %20, %22 : vector<8x128xf32>
    %24 = arith.truncf %23 : vector<8x128xf32> to vector<8x128xbf16>
    %c0_17 = arith.constant 0 : index
    %c0_18 = arith.constant 0 : index
    %25 = vector.load %arg8[%c0_17, %c0_18] : memref<128x128xbf16, #tpu.memory_space<vmem>>, vector<128x128xbf16>
    %cst_19 = arith.constant dense<0.000000e+00> : vector<8x128xf32>
    %26 = tpu.matmul %24, %25, %cst_19 {dimension_numbers = #tpu.dot_dimension_numbers<[1], [0], [0], [1], [0, 0, 1, 1], [], []>} : vector<8x128xbf16>, vector<128x128xbf16>, vector<8x128xf32> -> vector<8x128xf32>
    %c0_20 = arith.constant 0 : index
    %c0_21 = arith.constant 0 : index
    %27 = vector.load %arg9[%c0_20, %c0_21] : memref<1x128xf32, #tpu.memory_space<vmem>>, vector<1x128xf32>
    %28 = vector.broadcast %27 : vector<1x128xf32> to vector<8x128xf32>
    %29 = arith.addf %26, %28 : vector<8x128xf32>
    %cst_22 = arith.constant 2.000000e-01 : f32
    %30 = vector.broadcast %cst_22 : f32 to vector<8x128xf32>
    %31 = arith.mulf %30, %29 : vector<8x128xf32>
    %32 = arith.maximumf %29, %31 : vector<8x128xf32>
    %33 = arith.truncf %32 : vector<8x128xf32> to vector<8x128xbf16>
    %c0_23 = arith.constant 0 : index
    %c0_24 = arith.constant 0 : index
    %34 = vector.load %arg10[%c0_23, %c0_24] : memref<128x64xbf16, #tpu.memory_space<vmem>>, vector<128x64xbf16>
    %cst_25 = arith.constant dense<0.000000e+00> : vector<8x64xf32>
    %35 = tpu.matmul %33, %34, %cst_25 {dimension_numbers = #tpu.dot_dimension_numbers<[1], [0], [0], [1], [0, 0, 1, 1], [], []>} : vector<8x128xbf16>, vector<128x64xbf16>, vector<8x64xf32> -> vector<8x64xf32>
    %c0_26 = arith.constant 0 : index
    %c0_27 = arith.constant 0 : index
    %36 = vector.load %arg11[%c0_26, %c0_27] : memref<1x64xf32, #tpu.memory_space<vmem>>, vector<1x64xf32>
    %37 = vector.broadcast %36 : vector<1x64xf32> to vector<8x64xf32>
    %38 = arith.addf %35, %37 : vector<8x64xf32>
    %c0_28 = arith.constant 0 : index
    %c0_29 = arith.constant 0 : index
    %39 = vector.load %arg12[%c0_28, %c0_29] : memref<8x64xf32, #tpu.memory_space<vmem>>, vector<8x64xf32>
    tpu.vector_store %arg12[%c0_28, %c0_29], %38 {strides = array<i32>} : memref<8x64xf32, #tpu.memory_space<vmem>>, vector<8x64xf32>,
    return
  }
  func.func @transform_0(%arg0: i32) -> (i32, i32) {
    %c0_i32 = arith.constant 0 : i32
    %c0_i32_0 = arith.constant 0 : i32
    return %arg0, %c0_i32 : i32, i32
  }
  func.func @transform_1(%arg0: i32) -> (i32, i32) {
    %c0_i32 = arith.constant 0 : i32
    %c0_i32_0 = arith.constant 0 : i32
    return %arg0, %c0_i32 : i32, i32
  }
  func.func @transform_2(%arg0: i32) -> (i32, i32) {
    %c0_i32 = arith.constant 0 : i32
    %c0_i32_0 = arith.constant 0 : i32
    %c0_i32_1 = arith.constant 0 : i32
    return %c0_i32, %c0_i32_0 : i32, i32
  }
  func.func @transform_3(%arg0: i32) -> (i32, i32) {
    %c0_i32 = arith.constant 0 : i32
    %c0_i32_0 = arith.constant 0 : i32
    %c0_i32_1 = arith.constant 0 : i32
    return %c0_i32, %c0_i32_0 : i32, i32
  }
  func.func @transform_4(%arg0: i32) -> (i32, i32) {
    %c0_i32 = arith.constant 0 : i32
    %c0_i32_0 = arith.constant 0 : i32
    %c0_i32_1 = arith.constant 0 : i32
    return %c0_i32, %c0_i32_0 : i32, i32
  }
  func.func @transform_5(%arg0: i32) -> (i32, i32) {
    %c0_i32 = arith.constant 0 : i32
    %c0_i32_0 = arith.constant 0 : i32
    %c0_i32_1 = arith.constant 0 : i32
    return %c0_i32, %c0_i32_0 : i32, i32
  }
  func.func @transform_6(%arg0: i32) -> (i32, i32) {
    %c0_i32 = arith.constant 0 : i32
    %c0_i32_0 = arith.constant 0 : i32
    %c0_i32_1 = arith.constant 0 : i32
    return %c0_i32, %c0_i32_0 : i32, i32
  }
  func.func @transform_7(%arg0: i32) -> (i32, i32) {
    %c0_i32 = arith.constant 0 : i32
    %c0_i32_0 = arith.constant 0 : i32
    %c0_i32_1 = arith.constant 0 : i32
    return %c0_i32, %c0_i32_0 : i32, i32
  }
  func.func @transform_8(%arg0: i32) -> (i32, i32) {
    %c0_i32 = arith.constant 0 : i32
    %c0_i32_0 = arith.constant 0 : i32
    %c0_i32_1 = arith.constant 0 : i32
    return %c0_i32, %c0_i32_0 : i32, i32
  }
  func.func @transform_9(%arg0: i32) -> (i32, i32) {
    %c0_i32 = arith.constant 0 : i32
    %c0_i32_0 = arith.constant 0 : i32
    %c0_i32_1 = arith.constant 0 : i32
    return %c0_i32, %c0_i32_0 : i32, i32
  }
  func.func @transform_10(%arg0: i32) -> (i32, i32) {
    %c0_i32 = arith.constant 0 : i32
    %c0_i32_0 = arith.constant 0 : i32
    %c0_i32_1 = arith.constant 0 : i32
    return %c0_i32, %c0_i32_0 : i32, i32
  }
  func.func @transform_11(%arg0: i32) -> (i32, i32) {
    %c0_i32 = arith.constant 0 : i32
    %c0_i32_0 = arith.constant 0 : i32
    return %arg0, %c0_i32 : i32, i32
  }
}

</mosaic_0001>

<llo_original>
// kernel: mlp_g_forward.1
$region0: #{mlp_g_forward.1}
  #allocation0 [shape = 'u32[]', space=smem, size = 0x4, offset = 0x4, fixed_abs, tag = 'smem constant byte address 0x4 - core index']
  #allocation1 [shape = 'u32[144,128]{1,0:T(1,128)}', space=vmem, size = 0x12000, scoped, tag = 'internal scratch']
  %s0 = inlined_call_operand.hbm [shape: f32[8,32], index: 0, kind: input, shape index: {}]
  %s1 = inlined_call_operand.hbm [shape: f32[8,4], index: 1, kind: input, shape index: {}]
  %s2 = inlined_call_operand.hbm [shape: bf16[32,128], index: 2, kind: input, shape index: {}]
  %s3 = inlined_call_operand.hbm [shape: bf16[4,128], index: 3, kind: input, shape index: {}]
  %s4 = inlined_call_operand.hbm [shape: f32[1,128], index: 4, kind: input, shape index: {}]
  %s5 = inlined_call_operand.hbm [shape: bf16[128,128], index: 5, kind: input, shape index: {}]
  %s6 = inlined_call_operand.hbm [shape: f32[1,128], index: 6, kind: input, shape index: {}]
  %s7 = inlined_call_operand.hbm [shape: bf16[128,128], index: 7, kind: input, shape index: {}]
  %s8 = inlined_call_operand.hbm [shape: f32[1,128], index: 8, kind: input, shape index: {}]
  %s9 = inlined_call_operand.hbm [shape: bf16[128,64], index: 9, kind: input, shape index: {}]
  %s10 = inlined_call_operand.hbm [shape: f32[1,64], index: 10, kind: input, shape index: {}]
  %s11 = inlined_call_operand.hbm [shape: f32[8,64], index: 11, kind: output, shape index: {}]
  %s12 = sld [smem:[#allocation0]]
  $region98: #{mlp_g_forward.1} parent=0
    _
  %s14 = ssub.s32 1, %s12
  %s15 = scalar_select 0, %s14, %s12
  $region1: #{mlp_g_forward.1} parent=0
    #allocation2 [shape = 'u8[4096]{0}', space=vmem, size = 0x1000, scoped, tag = 'input window, operand 0, single buffered']
    #allocation3 [shape = 's32[1]{0}', space=sflag, size = 0x4, scoped, tag = 'scoped memory for mlp_g_forward.1']
    #allocation4 [shape = 's32[1]{0}', space=sflag, size = 0x4, scoped, tag = 'scoped memory for mlp_g_forward.1']
    #allocation5 [shape = 'u8[4096]{0}', space=vmem, size = 0x1000, scoped, tag = 'input window, operand 1, single buffered']
    #allocation6 [shape = 's32[1]{0}', space=sflag, size = 0x4, scoped, tag = 'scoped memory for mlp_g_forward.1']
    #allocation7 [shape = 'u8[8192]{0}', space=vmem, size = 0x2000, scoped, tag = 'input window, operand 2, single buffered']
    #allocation8 [shape = 'u8[1024]{0}', space=vmem, size = 0x400, scoped, tag = 'input window, operand 3, single buffered']
    #allocation9 [shape = 's32[1]{0}', space=sflag, size = 0x4, scoped, tag = 'scoped memory for mlp_g_forward.1']
    #allocation10 [shape = 'u8[512]{0}', space=vmem, size = 0x400, scoped, tag = 'input window, operand 4, single buffered']
    #allocation11 [shape = 'u8[32768]{0}', space=vmem, size = 0x8000, scoped, tag = 'input window, operand 5, single buffered']
    #allocation12 [shape = 's32[1]{0}', space=sflag, size = 0x4, scoped, tag = 'scoped memory for mlp_g_forward.1']
    #allocation13 [shape = 'u8[512]{0}', space=vmem, size = 0x400, scoped, tag = 'input window, operand 6, single buffered']
    #allocation14 [shape = 'u8[32768]{0}', space=vmem, size = 0x8000, scoped, tag = 'input window, operand 7, single buffered']
    #allocation15 [shape = 's32[1]{0}', space=sflag, size = 0x4, scoped, tag = 'scoped memory for mlp_g_forward.1']
    #allocation16 [shape = 'u8[512]{0}', space=vmem, size = 0x400, scoped, tag = 'input window, operand 8, single buffered']
    #allocation17 [shape = 'u8[32768]{0}', space=vmem, size = 0x8000, scoped, tag = 'input window, operand 9, single buffered']
    #allocation18 [shape = 's32[1]{0}', space=sflag, size = 0x4, scoped, tag = 'scoped memory for mlp_g_forward.1']
    #allocation19 [shape = 'u8[512]{0}', space=vmem, size = 0x400, scoped, tag = 'input window, operand 10, single buffered']
    #allocation20 [shape = 'u8[4096]{0}', space=vmem, size = 0x1000, scoped, tag = 'output window, operand 0, single buffered']
    %16 = vsyncpa [#allocation3], 0
    %17 = vsyncpa [#allocation6], 0
    %18 = vsyncpa [#allocation9], 0
    %19 = vsyncpa [#allocation12], 0
    %20 = vsyncpa [#allocation15], 0
    %21 = vsyncpa [#allocation18], 0
    %22 = vsyncpa [#allocation4], 0
    // Predicated region
    $region2: #{mlp_g_forward.1} parent=1 // pred_check
      _
    $region3: #{mlp_g_forward.1} parent=1 // pred_check_branch
      %24 = sbr.rel (0) target = $region5
    $region4: #{mlp_g_forward.1} parent=1 // pred_region
      %s26 = ssub.s32 128, 128
      %27 = vsyncadd [#allocation3], %s26
      %s29 = sshll.u32 [#allocation2], 4
      %s30 = int_to_ptr.vmem [resolvable:$true] %s29
      %32 = dma.hbm_to_vmem [thread:$0]  %s0, 128, %s30, [#allocation3]
    $region5: #{mlp_g_forward.1} parent=1 // pred_fallthru
      _
    // Predicated region
    $region6: #{mlp_g_forward.1} parent=1 // pred_check
      _
    $region7: #{mlp_g_forward.1} parent=1 // pred_check_branch
      %34 = sbr.rel (0) target = $region9
    $region8: #{mlp_g_forward.1} parent=1 // pred_region
      %s36 = ssub.s32 128, 128
      %37 = vsyncadd [#allocation6], %s36
      %s39 = sshll.u32 [#allocation5], 4
      %s40 = int_to_ptr.vmem [resolvable:$true] %s39
      %42 = dma.hbm_to_vmem [thread:$0]  %s1, 128, %s40, [#allocation6]
    $region9: #{mlp_g_forward.1} parent=1 // pred_fallthru
      _
    // Predicated region
    $region10: #{mlp_g_forward.1} parent=1 // pred_check
      _
    $region11: #{mlp_g_forward.1} parent=1 // pred_check_branch
      %44 = sbr.rel (0) target = $region13
    $region12: #{mlp_g_forward.1} parent=1 // pred_region
      %s46 = ssub.s32 256, 256
      %47 = vsyncadd [#allocation6], %s46
      %s48 = sshll.u32 [#allocation7], 4
      %s49 = int_to_ptr.vmem [resolvable:$true] %s48
      %54 = dma.hbm_to_vmem [thread:$0]  %s2, 256, %s49, [#allocation6], 64, 64, 4
    $region13: #{mlp_g_forward.1} parent=1 // pred_fallthru
      _
    // Predicated region
    $region14: #{mlp_g_forward.1} parent=1 // pred_check
      _
    $region15: #{mlp_g_forward.1} parent=1 // pred_check_branch
      %56 = sbr.rel (0) target = $region17
    $region16: #{mlp_g_forward.1} parent=1 // pred_region
      %s58 = ssub.s32 32, 32
      %59 = vsyncadd [#allocation9], %s58
      %s61 = sshll.u32 [#allocation8], 4
      %s62 = int_to_ptr.vmem [resolvable:$true] %s61
      %64 = dma.hbm_to_vmem [thread:$0]  %s3, 32, %s62, [#allocation9]
    $region17: #{mlp_g_forward.1} parent=1 // pred_fallthru
      _
    // Predicated region
    $region18: #{mlp_g_forward.1} parent=1 // pred_check
      _
    $region19: #{mlp_g_forward.1} parent=1 // pred_check_branch
      %66 = sbr.rel (0) target = $region21
    $region20: #{mlp_g_forward.1} parent=1 // pred_region
      %s68 = ssub.s32 16, 16
      %69 = vsyncadd [#allocation9], %s68
      %s71 = sshll.u32 [#allocation10], 4
      %s72 = int_to_ptr.vmem [resolvable:$true] %s71
      %74 = dma.hbm_to_vmem [thread:$0]  %s4, 16, %s72, [#allocation9]
    $region21: #{mlp_g_forward.1} parent=1 // pred_fallthru
      _
    // Predicated region
    $region22: #{mlp_g_forward.1} parent=1 // pred_check
      _
    $region23: #{mlp_g_forward.1} parent=1 // pred_check_branch
      %76 = sbr.rel (0) target = $region25
    $region24: #{mlp_g_forward.1} parent=1 // pred_region
      %s78 = ssub.s32 1024, 1024
      %79 = vsyncadd [#allocation12], %s78
      %s80 = sshll.u32 [#allocation11], 4
      %s81 = int_to_ptr.vmem [resolvable:$true] %s80
      %86 = dma.hbm_to_vmem [thread:$0]  %s5, 1024, %s81, [#allocation12], 64, 64, 4
    $region25: #{mlp_g_forward.1} parent=1 // pred_fallthru
      _
    // Predicated region
    $region26: #{mlp_g_forward.1} parent=1 // pred_check
      _
    $region27: #{mlp_g_forward.1} parent=1 // pred_check_branch
      %88 = sbr.rel (0) target = $region29
    $region28: #{mlp_g_forward.1} parent=1 // pred_region
      %s90 = ssub.s32 16, 16
      %91 = vsyncadd [#allocation12], %s90
      %s93 = sshll.u32 [#allocation13], 4
      %s94 = int_to_ptr.vmem [resolvable:$true] %s93
      %96 = dma.hbm_to_vmem [thread:$0]  %s6, 16, %s94, [#allocation12]
    $region29: #{mlp_g_forward.1} parent=1 // pred_fallthru
      _
    // Predicated region
    $region30: #{mlp_g_forward.1} parent=1 // pred_check
      _
    $region31: #{mlp_g_forward.1} parent=1 // pred_check_branch
      %98 = sbr.rel (0) target = $region33
    $region32: #{mlp_g_forward.1} parent=1 // pred_region
      %s100 = ssub.s32 1024, 1024
      %101 = vsyncadd [#allocation15], %s100
      %s102 = sshll.u32 [#allocation14], 4
      %s103 = int_to_ptr.vmem [resolvable:$true] %s102
      %108 = dma.hbm_to_vmem [thread:$0]  %s7, 1024, %s103, [#allocation15], 64, 64, 4
    $region33: #{mlp_g_forward.1} parent=1 // pred_fallthru
      _
    // Predicated region
    $region34: #{mlp_g_forward.1} parent=1 // pred_check
      _
    $region35: #{mlp_g_forward.1} parent=1 // pred_check_branch
      %110 = sbr.rel (0) target = $region37
    $region36: #{mlp_g_forward.1} parent=1 // pred_region
      %s112 = ssub.s32 16, 16
      %113 = vsyncadd [#allocation15], %s112
      %s115 = sshll.u32 [#allocation16], 4
      %s116 = int_to_ptr.vmem [resolvable:$true] %s115
      %118 = dma.hbm_to_vmem [thread:$0]  %s8, 16, %s116, [#allocation15]
    $region37: #{mlp_g_forward.1} parent=1 // pred_fallthru
      _
    // Predicated region
    $region38: #{mlp_g_forward.1} parent=1 // pred_check
      _
    $region39: #{mlp_g_forward.1} parent=1 // pred_check_branch
      %120 = sbr.rel (0) target = $region41
    $region40: #{mlp_g_forward.1} parent=1 // pred_region
      %s122 = ssub.s32 1024, 1024
      %123 = vsyncadd [#allocation18], %s122
      %s124 = sshll.u32 [#allocation17], 4
      %s125 = int_to_ptr.vmem [resolvable:$true] %s124
      %130 = dma.hbm_to_vmem [thread:$0]  %s9, 1024, %s125, [#allocation18], 64, 64, 4
    $region41: #{mlp_g_forward.1} parent=1 // pred_fallthru
      _
    // Predicated region
    $region42: #{mlp_g_forward.1} parent=1 // pred_check
      _
    $region43: #{mlp_g_forward.1} parent=1 // pred_check_branch
      %132 = sbr.rel (0) target = $region45
    $region44: #{mlp_g_forward.1} parent=1 // pred_region
      %s134 = ssub.s32 16, 16
      %135 = vsyncadd [#allocation18], %s134
      %s137 = sshll.u32 [#allocation19], 4
      %s138 = int_to_ptr.vmem [resolvable:$true] %s137
      %140 = dma.hbm_to_vmem [thread:$0]  %s10, 16, %s138, [#allocation18]
    $region45: #{mlp_g_forward.1} parent=1 // pred_fallthru
      _
    // Predicated region
    $region46: #{mlp_g_forward.1} parent=1 // pred_check
      _
    $region47: #{mlp_g_forward.1} parent=1 // pred_check_branch
      %142 = sbr.rel (0) target = $region49
    $region48: #{mlp_g_forward.1} parent=1 // pred_region
      %143 = dma.done [#allocation3], 128
    $region49: #{mlp_g_forward.1} parent=1 // pred_fallthru
      _
    // Predicated region
    $region50: #{mlp_g_forward.1} parent=1 // pred_check
      _
    $region51: #{mlp_g_forward.1} parent=1 // pred_check_branch
      %145 = sbr.rel (0) target = $region53
    $region52: #{mlp_g_forward.1} parent=1 // pred_region
      %146 = dma.done [#allocation6], 128
    $region53: #{mlp_g_forward.1} parent=1 // pred_fallthru
      _
    // Predicated region
    $region54: #{mlp_g_forward.1} parent=1 // pred_check
      _
    $region55: #{mlp_g_forward.1} parent=1 // pred_check_branch
      %148 = sbr.rel (0) target = $region57
    $region56: #{mlp_g_forward.1} parent=1 // pred_region
      %149 = dma.done [#allocation6], 256
    $region57: #{mlp_g_forward.1} parent=1 // pred_fallthru
      _
    // Predicated region
    $region58: #{mlp_g_forward.1} parent=1 // pred_check
      _
    $region59: #{mlp_g_forward.1} parent=1 // pred_check_branch
      %151 = sbr.rel (0) target = $region61
    $region60: #{mlp_g_forward.1} parent=1 // pred_region
      %152 = dma.done [#allocation9], 32
    $region61: #{mlp_g_forward.1} parent=1 // pred_fallthru
      _
    // Predicated region
    $region62: #{mlp_g_forward.1} parent=1 // pred_check
      _
    $region63: #{mlp_g_forward.1} parent=1 // pred_check_branch
      %154 = sbr.rel (0) target = $region65
    $region64: #{mlp_g_forward.1} parent=1 // pred_region
      %155 = dma.done [#allocation9], 16
    $region65: #{mlp_g_forward.1} parent=1 // pred_fallthru
      _
    // Predicated region
    $region66: #{mlp_g_forward.1} parent=1 // pred_check
      _
    $region67: #{mlp_g_forward.1} parent=1 // pred_check_branch
      %157 = sbr.rel (0) target = $region69
    $region68: #{mlp_g_forward.1} parent=1 // pred_region
      %158 = dma.done [#allocation12], 1024
    $region69: #{mlp_g_forward.1} parent=1 // pred_fallthru
      _
    // Predicated region
    $region70: #{mlp_g_forward.1} parent=1 // pred_check
      _
    $region71: #{mlp_g_forward.1} parent=1 // pred_check_branch
      %160 = sbr.rel (0) target = $region73
    $region72: #{mlp_g_forward.1} parent=1 // pred_region
      %161 = dma.done [#allocation12], 16
    $region73: #{mlp_g_forward.1} parent=1 // pred_fallthru
      _
    // Predicated region
    $region74: #{mlp_g_forward.1} parent=1 // pred_check
      _
    $region75: #{mlp_g_forward.1} parent=1 // pred_check_branch
      %163 = sbr.rel (0) target = $region77
    $region76: #{mlp_g_forward.1} parent=1 // pred_region
      %164 = dma.done [#allocation15], 1024
    $region77: #{mlp_g_forward.1} parent=1 // pred_fallthru
      _
    // Predicated region
    $region78: #{mlp_g_forward.1} parent=1 // pred_check
      _
    $region79: #{mlp_g_forward.1} parent=1 // pred_check_branch
      %166 = sbr.rel (0) target = $region81
    $region80: #{mlp_g_forward.1} parent=1 // pred_region
      %167 = dma.done [#allocation15], 16
    $region81: #{mlp_g_forward.1} parent=1 // pred_fallthru
      _
    // Predicated region
    $region82: #{mlp_g_forward.1} parent=1 // pred_check
      _
    $region83: #{mlp_g_forward.1} parent=1 // pred_check_branch
      %169 = sbr.rel (0) target = $region85
    $region84: #{mlp_g_forward.1} parent=1 // pred_region
      %170 = dma.done [#allocation18], 1024
    $region85: #{mlp_g_forward.1} parent=1 // pred_fallthru
      _
    // Predicated region
    $region86: #{mlp_g_forward.1} parent=1 // pred_check
      _
    $region87: #{mlp_g_forward.1} parent=1 // pred_check_branch
      %172 = sbr.rel (0) target = $region89
    $region88: #{mlp_g_forward.1} parent=1 // pred_region
      %173 = dma.done [#allocation18], 16
    $region89: #{mlp_g_forward.1} parent=1 // pred_fallthru
      _
    %v175 = vld [vmem:[#allocation2] sm:$0xff]
    %v176 = vpack.c.bf16 %v175, %v175
    %v177 = vld [vmem:[#allocation7] sm:$0xf]
    %v178 = vld [vmem:[#allocation7 + $0x4] sm:$0xf]
    %v179 = vld [vmem:[#allocation7 + $0x8] sm:$0xf]
    %v180 = vld [vmem:[#allocation7 + $0xc] sm:$0xf]
    %v181 = vld [vmem:[#allocation5] sm:$0xff]
    %v182 = vpack.c.bf16 %v181, %v181
    %v183 = vld [vmem:[#allocation8] sm:$0x3]
    %vm184 = vcmask 31744
    %v186 = vsel %vm184, %v182, 0
    %vm188 = vcmask 1041408
    %v190 = vsel %vm188, %v183, 0
    %192 = vmatprep.subr.bf16.mxu0 0
    %193 = vmatpush1.bf16.msra.mxu0 %v190
    %194 = vmatprep.subr.bf16.mxu0 0
    %195 = vmatpush1.bf16.msra.mxu0 0
    %196 = vmatprep.subr.bf16.mxu0 0
    %197 = vmatpush1.bf16.msra.mxu0 0
    %198 = vmatprep.subr.bf16.mxu0 0
    %199 = vmatpush1.bf16.msra.mxu0 0
    %200 = vmatprep.subr.bf16.mxu0 0
    %201 = vmatpush1.bf16.msra.mxu0 0
    %202 = vmatprep.subr.bf16.mxu0 0
    %203 = vmatpush1.bf16.msra.mxu0 0
    %204 = vmatprep.subr.bf16.mxu0 0
    %205 = vmatpush1.bf16.msra.mxu0 0
    %206 = vmatprep.subr.bf16.mxu0 0
    %207 = vmatpush1.bf16.msra.mxu0 0
    %208 = vmatprep.subr.bf16.mxu0 0
    %209 = vmatpush1.bf16.msra.mxu0 0
    %210 = vmatprep.subr.bf16.mxu0 0
    %211 = vmatpush1.bf16.msra.mxu0 0
    %212 = vmatprep.subr.bf16.mxu0 0
    %213 = vmatpush1.bf16.msra.mxu0 0
    %214 = vmatprep.subr.bf16.mxu0 0
    %215 = vmatpush1.bf16.msra.mxu0 0
    %216 = vmatprep.subr.bf16.mxu0 0
    %217 = vmatpush1.bf16.msra.mxu0 0
    %218 = vmatprep.subr.bf16.mxu0 0
    %219 = vmatpush1.bf16.msra.mxu0 0
    %220 = vmatprep.subr.bf16.mxu0 0
    %221 = vmatpush1.bf16.msra.mxu0 0
    %222 = vmatprep.subr.bf16.mxu0 0
    %223 = vmatpush1.bf16.msra.mxu0 0
    %224 = vmatprep.mubr.bf16.mxu0 0
    %225 = vmatmul.mubr.bf16.gmra.mrb[0].mxu0 %v186
    %v226 = vpop.f32.mrb[0].mxu0
    %v227 = vadd.f32 0.0, %v226
    %v228 = vpop.f32.mrb[0].mxu0
    %v229 = vpop.f32.mrb[0].mxu0
    %v230 = vpop.f32.mrb[0].mxu0
    %231 = vdwg.mxu0
    %v236 = vunpack.c.l.b16 %v177
    %v237 = vunpack.c.l.b16 %v178
    %v238 = vunpack.c.l.b16 %v179
    %v239 = vunpack.c.l.b16 %v180
    %v240 = vpack.c.b16 %v237, %v236
    %v241 = vpack.c.b16 %v239, %v238
    %vm244 = vcmask 261120
    %v246 = vsel %vm244, %v176, 0
    %248 = vmatprep.subr.bf16.mxu0 0
    %249 = vmatpush1.bf16.msra.mxu0 %v240
    %250 = vmatprep.subr.bf16.mxu0 0
    %251 = vmatpush1.bf16.msra.mxu0 %v241
    %252 = vmatprep.subr.bf16.mxu0 0
    %253 = vmatpush1.bf16.msra.mxu0 0
    %254 = vmatprep.subr.bf16.mxu0 0
    %255 = vmatpush1.bf16.msra.mxu0 0
    %256 = vmatprep.subr.bf16.mxu0 0
    %257 = vmatpush1.bf16.msra.mxu0 0
    %258 = vmatprep.subr.bf16.mxu0 0
    %259 = vmatpush1.bf16.msra.mxu0 0
    %260 = vmatprep.subr.bf16.mxu0 0
    %261 = vmatpush1.bf16.msra.mxu0 0
    %262 = vmatprep.subr.bf16.mxu0 0
    %263 = vmatpush1.bf16.msra.mxu0 0
    %264 = vmatprep.subr.bf16.mxu0 0
    %265 = vmatpush1.bf16.msra.mxu0 0
    %266 = vmatprep.subr.bf16.mxu0 0
    %267 = vmatpush1.bf16.msra.mxu0 0
    %268 = vmatprep.subr.bf16.mxu0 0
    %269 = vmatpush1.bf16.msra.mxu0 0
    %270 = vmatprep.subr.bf16.mxu0 0
    %271 = vmatpush1.bf16.msra.mxu0 0
    %272 = vmatprep.subr.bf16.mxu0 0
    %273 = vmatpush1.bf16.msra.mxu0 0
    %274 = vmatprep.subr.bf16.mxu0 0
    %275 = vmatpush1.bf16.msra.mxu0 0
    %276 = vmatprep.subr.bf16.mxu0 0
    %277 = vmatpush1.bf16.msra.mxu0 0
    %278 = vmatprep.subr.bf16.mxu0 0
    %279 = vmatpush1.bf16.msra.mxu0 0
    %280 = vmatprep.mubr.bf16.mxu0 0
    %281 = vmatmul.mubr.bf16.gmra.mrb[0].mxu0 %v246
    %v282 = vpop.f32.mrb[0].mxu0
    %v283 = vadd.f32 %v227, %v282
    %v284 = vpop.f32.mrb[0].mxu0
    %v285 = vpop.f32.mrb[0].mxu0
    %v286 = vpop.f32.mrb[0].mxu0
    %287 = vdwg.mxu0
    %v288 = vld [vmem:[#allocation10] sm:$0x1]
    %v290 = vlaneseq
    %v291 = vshrl.u32 %v290, 7
    %v292 = vsub.s32 0, %v291
    %v293 = vrot.slane %v288, %v292
    %v295 = vadd.f32 %v283, %v293
    %v296 = vmul.f32 %v295, 0.2
    %v297 = vmax.f32 %v295, %v296
    %v298 = vpack.c.bf16 %v297, %v297
    %v299 = vld [vmem:[#allocation11] sm:$0xf]
    %v300 = vld [vmem:[#allocation11 + $0x4] sm:$0xf]
    %v301 = vld [vmem:[#allocation11 + $0x8] sm:$0xf]
    %v302 = vld [vmem:[#allocation11 + $0xc] sm:$0xf]
    %v303 = vld [vmem:[#allocation11 + $0x10] sm:$0xf]
    %v304 = vld [vmem:[#allocation11 + $0x14] sm:$0xf]
    %v305 = vld [vmem:[#allocation11 + $0x18] sm:$0xf]
    %v306 = vld [vmem:[#allocation11 + $0x1c] sm:$0xf]
    %v307 = vld [vmem:[#allocation11 + $0x20] sm:$0xf]
    %v308 = vld [vmem:[#allocation11 + $0x24] sm:$0xf]
    %v309 = vld [vmem:[#allocation11 + $0x28] sm:$0xf]
    %v310 = vld [vmem:[#allocation11 + $0x2c] sm:$0xf]
    %v311 = vld [vmem:[#allocation11 + $0x30] sm:$0xf]
    %v312 = vld [vmem:[#allocation11 + $0x34] sm:$0xf]
    %v313 = vld [vmem:[#allocation11 + $0x38] sm:$0xf]
    %v314 = vld [vmem:[#allocation11 + $0x3c] sm:$0xf]
    %v315 = vld [vmem:[#allocation13] sm:$0x1]
    %v317 = vlaneseq
    %v318 = vshrl.u32 %v317, 7
    %v319 = vsub.s32 0, %v318
    %v320 = vrot.slane %v315, %v319
    %v338 = vunpack.c.l.b16 %v299
    %v339 = vunpack.c.l.b16 %v300
    %v340 = vunpack.c.l.b16 %v301
    %v341 = vunpack.c.l.b16 %v302
    %v342 = vunpack.c.l.b16 %v303
    %v343 = vunpack.c.l.b16 %v304
    %v344 = vunpack.c.l.b16 %v305
    %v345 = vunpack.c.l.b16 %v306
    %v346 = vunpack.c.l.b16 %v307
    %v347 = vunpack.c.l.b16 %v308
    %v348 = vunpack.c.l.b16 %v309
    %v349 = vunpack.c.l.b16 %v310
    %v350 = vunpack.c.l.b16 %v311
    %v351 = vunpack.c.l.b16 %v312
    %v352 = vunpack.c.l.b16 %v313
    %v353 = vunpack.c.l.b16 %v314
    %v354 = vpack.c.b16 %v339, %v338
    %v355 = vpack.c.b16 %v341, %v340
    %v356 = vpack.c.b16 %v343, %v342
    %v357 = vpack.c.b16 %v345, %v344
    %v358 = vpack.c.b16 %v347, %v346
    %v359 = vpack.c.b16 %v349, %v348
    %v360 = vpack.c.b16 %v351, %v350
    %v361 = vpack.c.b16 %v353, %v352
    %370 = vmatprep.subr.bf16.mxu0 0
    %371 = vmatpush1.bf16.msra.mxu0 %v354
    %372 = vmatprep.subr.bf16.mxu0 0
    %373 = vmatpush1.bf16.msra.mxu0 %v355
    %374 = vmatprep.subr.bf16.mxu0 0
    %375 = vmatpush1.bf16.msra.mxu0 %v356
    %376 = vmatprep.subr.bf16.mxu0 0
    %377 = vmatpush1.bf16.msra.mxu0 %v357
    %378 = vmatprep.subr.bf16.mxu0 0
    %379 = vmatpush1.bf16.msra.mxu0 %v358
    %380 = vmatprep.subr.bf16.mxu0 0
    %381 = vmatpush1.bf16.msra.mxu0 %v359
    %382 = vmatprep.subr.bf16.mxu0 0
    %383 = vmatpush1.bf16.msra.mxu0 %v360
    %384 = vmatprep.subr.bf16.mxu0 0
    %385 = vmatpush1.bf16.msra.mxu0 %v361
    %386 = vmatprep.subr.bf16.mxu0 0
    %387 = vmatpush1.bf16.msra.mxu0 0
    %388 = vmatprep.subr.bf16.mxu0 0
    %389 = vmatpush1.bf16.msra.mxu0 0
    %390 = vmatprep.subr.bf16.mxu0 0
    %391 = vmatpush1.bf16.msra.mxu0 0
    %392 = vmatprep.subr.bf16.mxu0 0
    %393 = vmatpush1.bf16.msra.mxu0 0
    %394 = vmatprep.subr.bf16.mxu0 0
    %395 = vmatpush1.bf16.msra.mxu0 0
    %396 = vmatprep.subr.bf16.mxu0 0
    %397 = vmatpush1.bf16.msra.mxu0 0
    %398 = vmatprep.subr.bf16.mxu0 0
    %399 = vmatpush1.bf16.msra.mxu0 0
    %400 = vmatprep.subr.bf16.mxu0 0
    %401 = vmatpush1.bf16.msra.mxu0 0
    %402 = vmatprep.mubr.bf16.mxu0 0
    %403 = vmatmul.mubr.bf16.gmra.mrb[0].mxu0 %v298
    %v404 = vpop.f32.mrb[0].mxu0
    %v405 = vadd.f32 %v320, %v404
    %v406 = vpop.f32.mrb[0].mxu0
    %v407 = vpop.f32.mrb[0].mxu0
    %v408 = vpop.f32.mrb[0].mxu0
    %409 = vdwg.mxu0
    %v410 = vmul.f32 %v405, 0.2
    %v411 = vmax.f32 %v405, %v410
    %v412 = vpack.c.bf16 %v411, %v411
    %v413 = vld [vmem:[#allocation14] sm:$0xf]
    %v414 = vld [vmem:[#allocation14 + $0x4] sm:$0xf]
    %v415 = vld [vmem:[#allocation14 + $0x8] sm:$0xf]
    %v416 = vld [vmem:[#allocation14 + $0xc] sm:$0xf]
    %v417 = vld [vmem:[#allocation14 + $0x10] sm:$0xf]
    %v418 = vld [vmem:[#allocation14 + $0x14] sm:$0xf]
    %v419 = vld [vmem:[#allocation14 + $0x18] sm:$0xf]
    %v420 = vld [vmem:[#allocation14 + $0x1c] sm:$0xf]
    %v421 = vld [vmem:[#allocation14 + $0x20] sm:$0xf]
    %v422 = vld [vmem:[#allocation14 + $0x24] sm:$0xf]
    %v423 = vld [vmem:[#allocation14 + $0x28] sm:$0xf]
    %v424 = vld [vmem:[#allocation14 + $0x2c] sm:$0xf]
    %v425 = vld [vmem:[#allocation14 + $0x30] sm:$0xf]
    %v426 = vld [vmem:[#allocation14 + $0x34] sm:$0xf]
    %v427 = vld [vmem:[#allocation14 + $0x38] sm:$0xf]
    %v428 = vld [vmem:[#allocation14 + $0x3c] sm:$0xf]
    %v429 = vld [vmem:[#allocation16] sm:$0x1]
    %v431 = vlaneseq
    %v432 = vshrl.u32 %v431, 7
    %v433 = vsub.s32 0, %v432
    %v434 = vrot.slane %v429, %v433
    %v452 = vunpack.c.l.b16 %v413
    %v453 = vunpack.c.l.b16 %v414
    %v454 = vunpack.c.l.b16 %v415
    %v455 = vunpack.c.l.b16 %v416
    %v456 = vunpack.c.l.b16 %v417
    %v457 = vunpack.c.l.b16 %v418
    %v458 = vunpack.c.l.b16 %v419
    %v459 = vunpack.c.l.b16 %v420
    %v460 = vunpack.c.l.b16 %v421
    %v461 = vunpack.c.l.b16 %v422
    %v462 = vunpack.c.l.b16 %v423
    %v463 = vunpack.c.l.b16 %v424
    %v464 = vunpack.c.l.b16 %v425
    %v465 = vunpack.c.l.b16 %v426
    %v466 = vunpack.c.l.b16 %v427
    %v467 = vunpack.c.l.b16 %v428
    %v468 = vpack.c.b16 %v453, %v452
    %v469 = vpack.c.b16 %v455, %v454
    %v470 = vpack.c.b16 %v457, %v456
    %v471 = vpack.c.b16 %v459, %v458
    %v472 = vpack.c.b16 %v461, %v460
    %v473 = vpack.c.b16 %v463, %v462
    %v474 = vpack.c.b16 %v465, %v464
    %v475 = vpack.c.b16 %v467, %v466
    %484 = vmatprep.subr.bf16.mxu0 0
    %485 = vmatpush1.bf16.msra.mxu0 %v468
    %486 = vmatprep.subr.bf16.mxu0 0
    %487 = vmatpush1.bf16.msra.mxu0 %v469
    %488 = vmatprep.subr.bf16.mxu0 0
    %489 = vmatpush1.bf16.msra.mxu0 %v470
    %490 = vmatprep.subr.bf16.mxu0 0
    %491 = vmatpush1.bf16.msra.mxu0 %v471
    %492 = vmatprep.subr.bf16.mxu0 0
    %493 = vmatpush1.bf16.msra.mxu0 %v472
    %494 = vmatprep.subr.bf16.mxu0 0
    %495 = vmatpush1.bf16.msra.mxu0 %v473
    %496 = vmatprep.subr.bf16.mxu0 0
    %497 = vmatpush1.bf16.msra.mxu0 %v474
    %498 = vmatprep.subr.bf16.mxu0 0
    %499 = vmatpush1.bf16.msra.mxu0 %v475
    %500 = vmatprep.subr.bf16.mxu0 0
    %501 = vmatpush1.bf16.msra.mxu0 0
    %502 = vmatprep.subr.bf16.mxu0 0
    %503 = vmatpush1.bf16.msra.mxu0 0
    %504 = vmatprep.subr.bf16.mxu0 0
    %505 = vmatpush1.bf16.msra.mxu0 0
    %506 = vmatprep.subr.bf16.mxu0 0
    %507 = vmatpush1.bf16.msra.mxu0 0
    %508 = vmatprep.subr.bf16.mxu0 0
    %509 = vmatpush1.bf16.msra.mxu0 0
    %510 = vmatprep.subr.bf16.mxu0 0
    %511 = vmatpush1.bf16.msra.mxu0 0
    %512 = vmatprep.subr.bf16.mxu0 0
    %513 = vmatpush1.bf16.msra.mxu0 0
    %514 = vmatprep.subr.bf16.mxu0 0
    %515 = vmatpush1.bf16.msra.mxu0 0
    %516 = vmatprep.mubr.bf16.mxu0 0
    %517 = vmatmul.mubr.bf16.gmra.mrb[0].mxu0 %v412
    %v518 = vpop.f32.mrb[0].mxu0
    %v519 = vadd.f32 %v434, %v518
    %v520 = vpop.f32.mrb[0].mxu0
    %v521 = vpop.f32.mrb[0].mxu0
    %v522 = vpop.f32.mrb[0].mxu0
    %523 = vdwg.mxu0
    %v524 = vmul.f32 %v519, 0.2
    %v525 = vmax.f32 %v519, %v524
    %v526 = vpack.c.bf16 %v525, %v525
    %v527 = vld [vmem:[#allocation17] sm:$0xf]
    %v528 = vld [vmem:[#allocation17 + $0x4] sm:$0xf]
    %v529 = vld [vmem:[#allocation17 + $0x8] sm:$0xf]
    %v530 = vld [vmem:[#allocation17 + $0xc] sm:$0xf]
    %v531 = vld [vmem:[#allocation17 + $0x10] sm:$0xf]
    %v532 = vld [vmem:[#allocation17 + $0x14] sm:$0xf]
    %v533 = vld [vmem:[#allocation17 + $0x18] sm:$0xf]
    %v534 = vld [vmem:[#allocation17 + $0x1c] sm:$0xf]
    %v535 = vld [vmem:[#allocation17 + $0x20] sm:$0xf]
    %v536 = vld [vmem:[#allocation17 + $0x24] sm:$0xf]
    %v537 = vld [vmem:[#allocation17 + $0x28] sm:$0xf]
    %v538 = vld [vmem:[#allocation17 + $0x2c] sm:$0xf]
    %v539 = vld [vmem:[#allocation17 + $0x30] sm:$0xf]
    %v540 = vld [vmem:[#allocation17 + $0x34] sm:$0xf]
    %v541 = vld [vmem:[#allocation17 + $0x38] sm:$0xf]
    %v542 = vld [vmem:[#allocation17 + $0x3c] sm:$0xf]
    %v543 = vld [vmem:[#allocation19] sm:$0x1]
    %v545 = vlaneseq
    %v546 = vshrl.u32 %v545, 7
    %v547 = vsub.s32 0, %v546
    %v548 = vrot.slane %v543, %v547
    %v566 = vunpack.c.l.b16 %v527
    %v567 = vunpack.c.l.b16 %v528
    %v568 = vunpack.c.l.b16 %v529
    %v569 = vunpack.c.l.b16 %v530
    %v570 = vunpack.c.l.b16 %v531
    %v571 = vunpack.c.l.b16 %v532
    %v572 = vunpack.c.l.b16 %v533
    %v573 = vunpack.c.l.b16 %v534
    %v574 = vunpack.c.l.b16 %v535
    %v575 = vunpack.c.l.b16 %v536
    %v576 = vunpack.c.l.b16 %v537
    %v577 = vunpack.c.l.b16 %v538
    %v578 = vunpack.c.l.b16 %v539
    %v579 = vunpack.c.l.b16 %v540
    %v580 = vunpack.c.l.b16 %v541
    %v581 = vunpack.c.l.b16 %v542
    %v582 = vpack.c.b16 %v567, %v566
    %v583 = vpack.c.b16 %v569, %v568
    %v584 = vpack.c.b16 %v571, %v570
    %v585 = vpack.c.b16 %v573, %v572
    %v586 = vpack.c.b16 %v575, %v574
    %v587 = vpack.c.b16 %v577, %v576
    %v588 = vpack.c.b16 %v579, %v578
    %v589 = vpack.c.b16 %v581, %v580
    %598 = vmatprep.subr.bf16.mxu0 0
    %599 = vmatpush1.bf16.msra.mxu0 %v582
    %600 = vmatprep.subr.bf16.mxu0 0
    %601 = vmatpush1.bf16.msra.mxu0 %v583
    %602 = vmatprep.subr.bf16.mxu0 0
    %603 = vmatpush1.bf16.msra.mxu0 %v584
    %604 = vmatprep.subr.bf16.mxu0 0
    %605 = vmatpush1.bf16.msra.mxu0 %v585
    %606 = vmatprep.subr.bf16.mxu0 0
    %607 = vmatpush1.bf16.msra.mxu0 %v586
    %608 = vmatprep.subr.bf16.mxu0 0
    %609 = vmatpush1.bf16.msra.mxu0 %v587
    %610 = vmatprep.subr.bf16.mxu0 0
    %611 = vmatpush1.bf16.msra.mxu0 %v588
    %612 = vmatprep.subr.bf16.mxu0 0
    %613 = vmatpush1.bf16.msra.mxu0 %v589
    %614 = vmatprep.subr.bf16.mxu0 0
    %615 = vmatpush1.bf16.msra.mxu0 0
    %616 = vmatprep.subr.bf16.mxu0 0
    %617 = vmatpush1.bf16.msra.mxu0 0
    %618 = vmatprep.subr.bf16.mxu0 0
    %619 = vmatpush1.bf16.msra.mxu0 0
    %620 = vmatprep.subr.bf16.mxu0 0
    %621 = vmatpush1.bf16.msra.mxu0 0
    %622 = vmatprep.subr.bf16.mxu0 0
    %623 = vmatpush1.bf16.msra.mxu0 0
    %624 = vmatprep.subr.bf16.mxu0 0
    %625 = vmatpush1.bf16.msra.mxu0 0
    %626 = vmatprep.subr.bf16.mxu0 0
    %627 = vmatpush1.bf16.msra.mxu0 0
    %628 = vmatprep.subr.bf16.mxu0 0
    %629 = vmatpush1.bf16.msra.mxu0 0
    %630 = vmatprep.mubr.bf16.mxu0 0
    %631 = vmatmul.mubr.bf16.gmra.mrb[0].mxu0 %v526
    %v632 = vpop.f32.mrb[0].mxu0
    %v633 = vadd.f32 %v548, %v632
    %v634 = vpop.f32.mrb[0].mxu0
    %v635 = vpop.f32.mrb[0].mxu0
    %v636 = vpop.f32.mrb[0].mxu0
    %637 = vdwg.mxu0
    %vm638 = vcmask 523264
    %639 = vst.msk [vmem:[#allocation20] sm:$0xff] %vm638, %v633
    // Predicated region
    $region90: #{mlp_g_forward.1} parent=1 // pred_check
      _
    $region91: #{mlp_g_forward.1} parent=1 // pred_check_branch
      %641 = sbr.rel (0) target = $region93
    $region92: #{mlp_g_forward.1} parent=1 // pred_region
      %s643 = ssub.s32 128, 128
      %644 = vsyncadd [#allocation4], %s643
      %s646 = sshll.u32 [#allocation20], 4
      %s647 = int_to_ptr.vmem [resolvable:$true] %s646
      %649 = dma.vmem_to_hbm [thread:$0]  %s647, 128, %s11, [#allocation4]
    $region93: #{mlp_g_forward.1} parent=1 // pred_fallthru
      _
    // Predicated region
    $region94: #{mlp_g_forward.1} parent=1 // pred_check
      _
    $region95: #{mlp_g_forward.1} parent=1 // pred_check_branch
      %651 = sbr.rel (0) target = $region97
    $region96: #{mlp_g_forward.1} parent=1 // pred_region
      %652 = dma.done [#allocation4], 128
    $region97: #{mlp_g_forward.1} parent=1 // pred_fallthru
      _
    %653 = vsyncpa [#allocation3], 1
    %654 = vsyncpa [#allocation6], 1
    %655 = vsyncpa [#allocation9], 1
    %656 = vsyncpa [#allocation12], 1
    %657 = vsyncpa [#allocation15], 1
    %658 = vsyncpa [#allocation18], 1
    %659 = vsyncpa [#allocation4], 1

</llo_original>
